<compile_context>
chip_gen: v5e
topology: v5e:2x2
jax: 0.10.0
libtpu: 0.0.40
codegen_flags: <defaults>
</compile_context>

<pallas_src>
import jax
import jax.numpy as jnp
from jax.experimental import pallas as pl
from jax.experimental.pallas import tpu as pltpu

NEG_SLOPE = 0.01


def crelu_kernel(x_ref, o_ref):
    # x_ref: (TN, TR, TL)   o_ref: (TN, 2, TR, TL)
    x = x_ref[...]
    m = x >= 0
    pos = jnp.where(m, x, NEG_SLOPE * x)      # leaky_relu(x)
    # leaky_relu(-x), reusing the same compare. (The algebraic rewrite
    # `pos - 1.01*x` saves ~2 VALU ops but is not bit-exact; the body is fully
    # hidden under HBM DMA either way, so keep the exact form.)
    neg = jnp.where(m, -NEG_SLOPE * x, -x)
    o_ref[:, 0, :, :] = pos.astype(o_ref.dtype)
    o_ref[:, 1, :, :] = neg.astype(o_ref.dtype)


def _cdiv(a, b):
    return -(-a // b)


def _round_down(v, a):
    return (v // a) * a


def _tpu_vmem_capacity():
    try:
        get_info = getattr(pltpu, "get_tpu_info", None)
        if get_info is None:
            return None
        return getattr(get_info(), "vmem_capacity_bytes", None)
    except Exception:
        return None


def _choose_tiles(N, R, L, itemsize, target_bytes, min_steps, total_bytes):
    # Lane tile: multiple of 128 (ragged masked tail via cdiv grid), or the
    # full dim when L <= 128.
    if L <= 128:
        TL = L
    else:
        TL = min(_round_down(L, 128), 2048)
    # Sublane tile: multiple of 8, sized so TR*TL*itemsize ~<= target.
    if R <= 8:
        TR = R
    else:
        rows_budget = max(8, target_bytes // (TL * itemsize))
        TR = min(_round_down(R, 8), _round_down(rows_budget, 8))
    # Batch tile: fill the remaining per-block budget with whole samples.
    per_sample = max(TR * TL * itemsize, 1)
    TN = int(max(1, min(N, target_bytes // per_sample)))

    # Multi-MiB inputs: expose enough grid steps for megacore / pipelining.
    if total_bytes >= (1 << 20):
        while _cdiv(N, TN) * _cdiv(R, TR) * _cdiv(L, TL) < min_steps:
            if TN > 1:
                TN = _cdiv(TN, 2)
            elif TR > 8:
                TR = max(8, _round_down(TR // 2, 8))
            elif TL > 128:
                TL = max(128, _round_down(TL // 2, 128))
            else:
                break
    return TN, TR, TL


def crelu(x, *, force_pallas=False):
    """x: (N, C, H, W) -> (N, 2C, H, W) = cat(leaky_relu(x), leaky_relu(-x), dim=1)."""
    N, C, H, W = x.shape
    HW = H * W
    itemsize = jnp.dtype(x.dtype).itemsize
    total_bytes = x.size * itemsize

    # Small-input fast path: launch/pipeline setup dominates below ~1 MiB.
    if total_bytes < (1 << 20) and not force_pallas:
        m = x >= 0
        pos = jnp.where(m, x, NEG_SLOPE * x)
        neg = jnp.where(m, -NEG_SLOPE * x, -x)
        return jnp.concatenate([pos, neg], axis=1)

    # Lane-dense flattening: prefer (R, L) = (C, H*W); if H*W is not 128-aligned
    # but W is, fold H into the sublane axis so the lane dim stays unmasked.
    if HW % 128 != 0 and W % 128 == 0:
        R, L = C * H, W
    else:
        R, L = C, HW
    x2 = x.reshape(N, R, L)

    vmem_cap = _tpu_vmem_capacity()
    small_vmem = vmem_cap is not None and vmem_cap <= 80 * 1024 * 1024  # v7x-like
    target_bytes = (4 if small_vmem else 2) * 1024 * 1024
    min_steps = 8 if small_vmem else 2  # v7x: keep both TensorCores busy

    TN, TR, TL = _choose_tiles(N, R, L, itemsize, target_bytes, min_steps, total_bytes)
    grid = (_cdiv(N, TN), _cdiv(R, TR), _cdiv(L, TL))

    # VMEM: double-buffered input block + double-buffered 2x-sized output block.
    block_in = TN * TR * TL * itemsize
    need = 2 * (block_in + 2 * block_in)
    vmem_limit = int(min(32 * 1024 * 1024,
                         max(need + need // 4 + (1 << 20), 8 * 1024 * 1024)))

    cost = pl.CostEstimate(
        flops=4 * x.size,
        transcendentals=0,
        bytes_accessed=3 * total_bytes,
    )

    out = pl.pallas_call(
        crelu_kernel,
        out_shape=jax.ShapeDtypeStruct((N, 2, R, L), x.dtype),
        grid_spec=pltpu.PrefetchScalarGridSpec(
            num_scalar_prefetch=0,
            grid=grid,
            in_specs=[pl.BlockSpec((TN, TR, TL), lambda n, r, l: (n, r, l))],
            out_specs=pl.BlockSpec((TN, 2, TR, TL), lambda n, r, l: (n, 0, r, l)),
        ),
        compiler_params=pltpu.CompilerParams(
            dimension_semantics=("parallel", "parallel", "parallel"),
            vmem_limit_bytes=vmem_limit,
        ),
        cost_estimate=cost,
    )(x2)

    # (N, 2, R, L) row-major == (N, 2, C, H, W) row-major -> free reshape.
    return out.reshape(N, 2 * C, H, W)


def _crelu_ref(x):
    return jnp.concatenate(
        [jnp.where(x >= 0, x, NEG_SLOPE * x),
         jnp.where(-x >= 0, -x, NEG_SLOPE * (-x))],
        axis=1,
    )


if __name__ == "__main__":
    key = jax.random.PRNGKey(0)
    k1, k2, k3, k4 = jax.random.split(key, 4)

    # Primary shape from the module spec (C < 8 -> full-C sublane tile path).
    x1 = jax.random.normal(k1, (2, 4, 16, 16), dtype=jnp.float32)
    y1 = jax.block_until_ready(crelu(x1, force_pallas=True))
    assert y1.shape == (2, 8, 16, 16)
    assert jnp.allclose(y1, _crelu_ref(x1), atol=1e-6), "mismatch (shape 1)"

    # 8-aligned sublane tile path.
    x2 = jax.random.normal(k2, (2, 16, 8, 16), dtype=jnp.float32)
    y2 = jax.block_until_ready(crelu(x2, force_pallas=True))
    assert y2.shape == (2, 32, 8, 16)
    assert jnp.allclose(y2, _crelu_ref(x2), atol=1e-6), "mismatch (shape 2)"

    # Unaligned shape: ragged sublane + lane tails (masked partial blocks).
    x3 = jax.random.normal(k3, (2, 12, 10, 20), dtype=jnp.float32)
    y3 = jax.block_until_ready(crelu(x3, force_pallas=True))
    assert y3.shape == (2, 24, 10, 20)
    assert jnp.allclose(y3, _crelu_ref(x3), atol=1e-6), "mismatch (shape 3)"

    # Small-C, multi-sample shape exercising TN (batch) blocking.
    x4 = jax.random.normal(k4, (8, 4, 32, 32), dtype=jnp.float32)
    y4 = jax.block_until_ready(crelu(x4, force_pallas=True))
    assert y4.shape == (8, 8, 32, 32)
    assert jnp.allclose(y4, _crelu_ref(x4), atol=1e-6), "mismatch (shape 4)"

    # Fast (non-Pallas) path sanity check for tiny inputs.
    y1_fast = jax.block_until_ready(crelu(x1))
    assert jnp.allclose(y1_fast, y1, atol=0.0)

    print("KERNEL_OK")
</pallas_src>

<mosaic_0001>
module attributes {stable_mosaic.version = 11 : i64} {
  func.func @crelu_kernel(%arg0: i32, %arg1: i32, %arg2: i32, %arg3: memref<2x4x256xf32, #tpu.memory_space<vmem>>, %arg4: memref<2x2x4x256xf32, #tpu.memory_space<vmem>>) attributes {dimension_semantics = [#tpu.dimension_semantics<parallel>, #tpu.dimension_semantics<parallel>, #tpu.dimension_semantics<parallel>], iteration_bounds = array<i64: 1, 1, 1>, scalar_prefetch = 0 : i64, scratch_operands = 0 : i64, tpu.core_type = #tpu.core_type<tc>, window_params = [{transform_indices = @transform_0, window_bounds = array<i64: 2, 4, 256>}, {transform_indices = @transform_1, window_bounds = array<i64: 2, 2, 4, 256>}]} {
    %c0 = arith.constant 0 : index
    %c0_0 = arith.constant 0 : index
    %c0_1 = arith.constant 0 : index
    %0 = vector.load %arg3[%c0, %c0_0, %c0_1] : memref<2x4x256xf32, #tpu.memory_space<vmem>>, vector<2x4x256xf32>
    %cst = arith.constant 0.000000e+00 : f32
    %1 = vector.broadcast %cst : f32 to vector<2x4x256xf32>
    %2 = arith.cmpf oge, %0, %1 : vector<2x4x256xf32>
    %cst_2 = arith.constant 0.00999999977 : f32
    %3 = vector.broadcast %cst_2 : f32 to vector<2x4x256xf32>
    %4 = arith.mulf %3, %0 : vector<2x4x256xf32>
    %5 = arith.select %2, %0, %4 : vector<2x4x256xi1>, vector<2x4x256xf32>
    %cst_3 = arith.constant -0.00999999977 : f32
    %6 = vector.broadcast %cst_3 : f32 to vector<2x4x256xf32>
    %7 = arith.mulf %6, %0 : vector<2x4x256xf32>
    %cst_4 = arith.constant 0.000000e+00 : f32
    %8 = vector.broadcast %cst_4 : f32 to vector<2x4x256xf32>
    %9 = arith.subf %8, %0 : vector<2x4x256xf32>
    %10 = arith.select %2, %7, %9 : vector<2x4x256xi1>, vector<2x4x256xf32>
    %c0_5 = arith.constant 0 : index
    %c0_6 = arith.constant 0 : index
    %c0_7 = arith.constant 0 : index
    %c0_8 = arith.constant 0 : index
    %11 = vector.load %arg4[%c0_5, %c0_6, %c0_7, %c0_8] : memref<2x2x4x256xf32, #tpu.memory_space<vmem>>, vector<2x1x4x256xf32>
    %12 = vector.shape_cast %11 : vector<2x1x4x256xf32> to vector<2x4x256xf32>
    %13 = vector.shape_cast %5 : vector<2x4x256xf32> to vector<2x1x4x256xf32>
    tpu.vector_store %arg4[%c0_5, %c0_6, %c0_7, %c0_8], %13 {strides = array<i32>} : memref<2x2x4x256xf32, #tpu.memory_space<vmem>>, vector<2x1x4x256xf32>,
    %c0_9 = arith.constant 0 : index
    %c1 = arith.constant 1 : index
    %c0_10 = arith.constant 0 : index
    %c0_11 = arith.constant 0 : index
    %14 = vector.load %arg4[%c0_9, %c1, %c0_10, %c0_11] : memref<2x2x4x256xf32, #tpu.memory_space<vmem>>, vector<2x1x4x256xf32>
    %15 = vector.shape_cast %14 : vector<2x1x4x256xf32> to vector<2x4x256xf32>
    %16 = vector.shape_cast %10 : vector<2x4x256xf32> to vector<2x1x4x256xf32>
    tpu.vector_store %arg4[%c0_9, %c1, %c0_10, %c0_11], %16 {strides = array<i32>} : memref<2x2x4x256xf32, #tpu.memory_space<vmem>>, vector<2x1x4x256xf32>,
    return
  }
  func.func @transform_0(%arg0: i32, %arg1: i32, %arg2: i32) -> (i32, i32, i32) {
    %c0_i32 = arith.constant 0 : i32
    return %arg0, %arg1, %arg2 : i32, i32, i32
  }
  func.func @transform_1(%arg0: i32, %arg1: i32, %arg2: i32) -> (i32, i32, i32, i32) {
    %c0_i32 = arith.constant 0 : i32
    %c0_i32_0 = arith.constant 0 : i32
    return %arg0, %c0_i32, %arg1, %arg2 : i32, i32, i32, i32
  }
}

</mosaic_0001>

<llo_original>
// kernel: tpu_custom_call.1
$region0: #{tpu_custom_call.1}
  #allocation0 [shape = 'u32[]', space=smem, size = 0x4, offset = 0x4, fixed_abs, tag = 'smem constant byte address 0x4 - core index']
  #allocation1 [shape = 'u32[72,128]{1,0:T(1,128)}', space=vmem, size = 0x9000, scoped, tag = 'internal scratch']
  %s0 = inlined_call_operand.hbm [shape: f32[2,4,256], index: 0, kind: input, shape index: {}]
  %s1 = inlined_call_operand.hbm [shape: f32[2,2,4,256], index: 1, kind: output, shape index: {}]
  %s2 = sld [smem:[#allocation0]]
  $region18: #{tpu_custom_call.1} parent=0
    _
  %s4 = ssub.s32 1, %s2
  %s5 = scalar_select 0, %s4, %s2
  $region1: #{tpu_custom_call.1} parent=0
    #allocation2 [shape = 'u8[8192]{0}', space=vmem, size = 0x2000, scoped, tag = 'input window, operand 0, single buffered']
    #allocation3 [shape = 's32[1]{0}', space=sflag, size = 0x4, scoped, tag = 'scoped memory for tpu_custom_call.1']
    #allocation4 [shape = 's32[1]{0}', space=sflag, size = 0x4, scoped, tag = 'scoped memory for tpu_custom_call.1']
    #allocation5 [shape = 'u8[16384]{0}', space=vmem, size = 0x4000, scoped, tag = 'output window, operand 0, single buffered']
    %6 = vsyncpa [#allocation3], 0
    %7 = vsyncpa [#allocation4], 0
    // Predicated region
    $region2: #{tpu_custom_call.1} parent=1 // pred_check
      _
    $region3: #{tpu_custom_call.1} parent=1 // pred_check_branch
      %9 = sbr.rel (0) target = $region5
    $region4: #{tpu_custom_call.1} parent=1 // pred_region
      %11 = vsyncadd [#allocation3], 0
      %s12 = sshll.u32 %s0, 4
      %s13 = int_to_ptr.hbm [resolvable:$true] %s12
      %s14 = sshll.u32 [#allocation2], 4
      %s15 = int_to_ptr.vmem [resolvable:$true] %s14
      %20 = dma.hbm_to_vmem [thread:$0]  %s13, 256, %s15, [#allocation3], 128, 128, 8
    $region5: #{tpu_custom_call.1} parent=1 // pred_fallthru
      _
    // Predicated region
    $region6: #{tpu_custom_call.1} parent=1 // pred_check
      _
    $region7: #{tpu_custom_call.1} parent=1 // pred_check_branch
      %22 = sbr.rel (0) target = $region9
    $region8: #{tpu_custom_call.1} parent=1 // pred_region
      %24 = dma.done [#allocation3], 256
    $region9: #{tpu_custom_call.1} parent=1 // pred_fallthru
      _
    %v25 = vld [vmem:[#allocation2] sm:$0xff]
    %v26 = vld [vmem:[#allocation2 + $0x8] sm:$0xff]
    %vm27 = vcmp.ge.f32.partialorder %v25, 0.0
    %vm28 = vcmp.ge.f32.partialorder %v26, 0.0
    %v29 = vmul.f32 %v25, 0.01
    %v30 = vmul.f32 %v26, 0.01
    %v31 = vsel %vm27, %v25, %v29
    %v32 = vsel %vm28, %v26, %v30
    %v33 = vmul.f32 %v25, -0.01
    %v34 = vmul.f32 %v26, -0.01
    %v35 = vsub.f32 0.0, %v25
    %v36 = vsub.f32 0.0, %v26
    %v37 = vsel %vm27, %v33, %v35
    %v38 = vsel %vm28, %v34, %v36
    %39 = vst [vmem:[#allocation5] sm:$0xff] %v31
    %40 = vst [vmem:[#allocation5 + $0x10] sm:$0xff] %v32
    %s41 = scalar_lea.vmem [#allocation5], 8
    %42 = vst [vmem:[%s41] sm:$0xff] %v37
    %43 = vst [vmem:[%s41 + $0x10] sm:$0xff] %v38
    // Predicated region
    $region10: #{tpu_custom_call.1} parent=1 // pred_check
      _
    $region11: #{tpu_custom_call.1} parent=1 // pred_check_branch
      %45 = sbr.rel (0) target = $region13
    $region12: #{tpu_custom_call.1} parent=1 // pred_region
      %47 = vsyncadd [#allocation4], 0
      %s48 = sshll.u32 [#allocation5], 4
      %s49 = int_to_ptr.vmem [resolvable:$true] %s48
      %s50 = sshll.u32 %s1, 4
      %s51 = int_to_ptr.hbm [resolvable:$true] %s50
      %56 = dma.vmem_to_hbm [thread:$0]  %s49, 512, %s51, [#allocation4], 128, 128, 8
    $region13: #{tpu_custom_call.1} parent=1 // pred_fallthru
      _
    // Predicated region
    $region14: #{tpu_custom_call.1} parent=1 // pred_check
      _
    $region15: #{tpu_custom_call.1} parent=1 // pred_check_branch
      %58 = sbr.rel (0) target = $region17
    $region16: #{tpu_custom_call.1} parent=1 // pred_region
      %60 = dma.done [#allocation4], 512
    $region17: #{tpu_custom_call.1} parent=1 // pred_fallthru
      _
    %61 = vsyncpa [#allocation3], 1
    %62 = vsyncpa [#allocation4], 1

</llo_original>
